<compile_context>
chip_gen: v6e
topology: v6e:2x2x1
jax: 0.10.0
libtpu: 0.0.40
codegen_flags: <defaults>
</compile_context>

<pallas_src>
import functools

import jax
import jax.numpy as jnp
import numpy as np
from jax import lax
from jax.experimental import pallas as pl
from jax.experimental.pallas import tpu as pltpu


def make_pixelcnn_mask_a(out_channels, in_channels, kernel_size, masked_channels):
    """Type-'A' PixelCNN mask (only first `masked_channels` input channels masked)."""
    kH = kW = kernel_size
    mask = np.ones((out_channels, in_channels, kH, kW), np.float32)
    # center row: center pixel and everything to its right is hidden (type 'A')
    mask[:, :masked_channels, kH // 2, kW // 2:] = 0.0
    # all rows below center are hidden
    mask[:, :masked_channels, kH // 2 + 1:, :] = 0.0
    return mask


def _boundary_mask(dh, dw, H, W, L):
    """1.0 where the (dh, dw)-shifted source pixel lies inside the image, else 0.

    Periodic in H*W, so the same row is valid for every image stacked on the
    lane axis and also masks cross-image bleed / cyclic wrap of the roll."""
    HW = H * W
    q = np.arange(L)
    p = q % HW
    h = p // W
    w = p % W
    ok = (h + dh >= 0) & (h + dh < H) & (w + dw >= 0) & (w + dw < W)
    return ok.astype(np.float32)


def _mask_a_kernel(w_ref, b_ref, m_ref, x_ref, o_ref, *, plan, C_out, L, n_acc):
    """One batch-block (B_blk images stacked on lanes) per grid step.

    w_ref : VMEM (A, C_out, L)   pre-broadcast masked conv weights (f32)
    b_ref : VMEM (C_out, 1)      bias column (f32)
    m_ref : VMEM (n_mask, L)     boundary masks, one per non-zero tap shift (f32)
    x_ref : VMEM (C_in, L)       input block, L = B_blk * H * W on lanes
    o_ref : VMEM (C_out, L)      output block
    plan  : static tuple of (flat_shift, mask_row_or_None, ((ci, tap_idx), ...))
    """
    x = x_ref[...].astype(jnp.float32)                        # (C_in, L)

    # Partial accumulators -> independent VALU dependency chains (ILP).
    accs = [jnp.broadcast_to(b_ref[...], (C_out, L))]         # acc0 starts at bias
    for _ in range(1, n_acc):
        accs.append(jnp.zeros((C_out, L), jnp.float32))

    t = 0
    for off, mi, members in plan:                             # statically pruned taps
        # Shifted patch for all input channels at once: rolled[q] = x[q + off].
        rolled = x if off == 0 else pltpu.roll(x, shift=(-off) % L, axis=1)
        bmask = None if mi is None else m_ref[mi:mi + 1, :]   # (1, L)
        for ci, a in members:
            patch = rolled[ci:ci + 1, :]                      # (1, L)
            if bmask is not None:
                patch = patch * bmask                         # kill out-of-image bleed
            accs[t % n_acc] = accs[t % n_acc] + w_ref[a] * patch
            t += 1

    y = accs[0]
    for k in range(1, n_acc):
        y = y + accs[k]

    # ELU(alpha=1): single EUP exp; negative branch only selected for y <= 0.
    o_ref[...] = jnp.where(y > 0.0, y, jnp.exp(y) - 1.0).astype(o_ref.dtype)


def _pick_block_batch(N, requested):
    """Images stacked on lanes per grid step.

    Capped by vreg pressure (~8 images -> 2 vregs of accumulator per image),
    must divide N, and leaves >= 2 grid steps whenever N >= 2 so the batch
    grid axis can be sharded across both v7x TensorCores."""
    bb = max(1, min(int(requested), N))
    if N >= 2:
        bb = max(1, min(bb, N // 2))
    while N % bb:
        bb -= 1
    return bb


def mask_a_block(x, weight, bias, masked_channels, *, block_batch=8):
    """Forward of MaskABlock: MaskedConv2d(mask 'A', padding=k//2, bias) + ELU."""
    N, C_in, H, W = x.shape
    C_out, C_in_w, KH, KW = weight.shape
    assert C_in_w == C_in and KH == KW
    pad = KH // 2
    HW = H * W
    assert HW % 128 == 0, "flattened spatial extent must be lane-aligned"

    B_blk = _pick_block_batch(N, block_batch)
    n_blocks = N // B_blk
    L = B_blk * HW                                  # lanes per block

    # Static 'A' mask -> masked weights + statically-active tap plan (per shift).
    mask_np = make_pixelcnn_mask_a(C_out, C_in, KH, masked_channels)
    w_masked = weight.astype(jnp.float32) * jnp.asarray(mask_np)   # (C_out,C_in,KH,KW)

    plan = []          # (flat_shift, mask_row_or_None, ((ci, tap_idx), ...))
    w_cols = []        # active tap weight columns, each (C_out,)
    mask_rows = []     # boundary masks, each (L,)
    a = 0
    for kh in range(KH):
        for kw_ in range(KW):
            cis = [ci for ci in range(C_in) if mask_np[0, ci, kh, kw_] != 0.0]
            if not cis:
                continue                            # trace-time tap pruning
            dh, dw = kh - pad, kw_ - pad
            mi = None
            if dh != 0 or dw != 0:
                mi = len(mask_rows)
                mask_rows.append(_boundary_mask(dh, dw, H, W, L))
            members = []
            for ci in cis:
                w_cols.append(w_masked[:, ci, kh, kw_])
                members.append((ci, a))
                a += 1
            plan.append((dh * W + dw, mi, tuple(members)))
    plan = tuple(plan)
    A = a

    if A == 0:   # degenerate: every tap masked out -> conv output is just the bias
        y = jnp.broadcast_to(bias.astype(x.dtype)[None, :, None, None],
                             (N, C_out, H, W))
        return jnp.where(y > 0, y, jnp.expm1(y))

    # Pre-broadcast weights along lanes: each tap is a plain vld in the kernel.
    w_b = jnp.broadcast_to(jnp.stack(w_cols, axis=0)[:, :, None],
                           (A, C_out, L)).astype(jnp.float32)
    b_col = bias.astype(jnp.float32).reshape(C_out, 1)
    masks = jnp.asarray(np.stack(mask_rows, axis=0) if mask_rows
                        else np.ones((1, L), np.float32))
    n_mask = masks.shape[0]

    # Layout plumbing only: stack the batch on the lane axis -> (C_in, N*HW).
    x_stacked = jnp.transpose(x.reshape(N, C_in, HW), (1, 0, 2)).reshape(C_in, N * HW)

    # Small blocks need explicit ILP across the tap chain; big blocks already
    # have many independent vregs per accumulator.
    n_acc = max(1, min(4, 2048 // L))

    kernel = functools.partial(_mask_a_kernel, plan=plan, C_out=C_out, L=L, n_acc=n_acc)

    out = pl.pallas_call(
        kernel,
        out_shape=jax.ShapeDtypeStruct((C_out, N * HW), x.dtype),
        grid_spec=pltpu.PrefetchScalarGridSpec(
            num_scalar_prefetch=0,
            grid=(n_blocks,),
            in_specs=[
                pl.BlockSpec((A, C_out, L), lambda n: (0, 0, 0)),   # weights (resident)
                pl.BlockSpec((C_out, 1), lambda n: (0, 0)),         # bias column
                pl.BlockSpec((n_mask, L), lambda n: (0, 0)),        # boundary masks
                pl.BlockSpec((C_in, L), lambda n: (0, n)),          # input block
            ],
            out_specs=pl.BlockSpec((C_out, L), lambda n: (0, n)),
        ),
        compiler_params=pltpu.CompilerParams(
            dimension_semantics=("parallel",)),     # batch blocks are independent
    )(w_b, b_col, masks, x_stacked)

    return jnp.transpose(out.reshape(C_out, N, HW), (1, 0, 2)).reshape(N, C_out, H, W)


def mask_a_block_reference(x, weight, bias, masked_channels):
    """Pure-JAX reference (lax conv) for validation."""
    C_out, C_in, KH, KW = weight.shape
    pad = KH // 2
    mask = jnp.asarray(make_pixelcnn_mask_a(C_out, C_in, KH, masked_channels))
    w_masked = weight * mask
    y = lax.conv_general_dilated(
        x, w_masked, window_strides=(1, 1),
        padding=((pad, pad), (pad, pad)),
        dimension_numbers=("NCHW", "OIHW", "NCHW"),
        precision=lax.Precision.HIGHEST,
    )
    y = y + bias[None, :, None, None]
    return jnp.where(y > 0, y, jnp.expm1(y))


if __name__ == "__main__":
    # MaskABlock(in_channels=4, out_channels=8, kernel_size=3, masked_channels=2)
    N, C_in, H, W = 2, 4, 16, 16
    C_out, K, masked_channels = 8, 3, 2

    key = jax.random.PRNGKey(0)
    kx, kw, kb = jax.random.split(key, 3)
    x = jax.random.normal(kx, (N, C_in, H, W), jnp.float32)
    # deterministic synthetic params (module uses normal(0, 0.05) weights)
    weight = 0.05 * jax.random.normal(kw, (C_out, C_in, K, K), jnp.float32)
    bias = 0.05 * jax.random.normal(kb, (C_out,), jnp.float32)

    out = mask_a_block(x, weight, bias, masked_channels)
    out = jax.block_until_ready(out)

    ref = mask_a_block_reference(x, weight, bias, masked_channels)
    np.testing.assert_allclose(np.asarray(out), np.asarray(ref), rtol=1e-4, atol=1e-4)

    print("KERNEL_OK")
</pallas_src>

<mosaic_0001>
module attributes {stable_mosaic.version = 11 : i64} {
  func.func @_mask_a_kernel(%arg0: i32, %arg1: memref<26x8x256xf32, #tpu.memory_space<vmem>>, %arg2: memref<8x1xf32, #tpu.memory_space<vmem>>, %arg3: memref<8x256xf32, #tpu.memory_space<vmem>>, %arg4: memref<4x256xf32, #tpu.memory_space<vmem>>, %arg5: memref<8x256xf32, #tpu.memory_space<vmem>>) attributes {dimension_semantics = [#tpu.dimension_semantics<parallel>], iteration_bounds = array<i64: 2>, scalar_prefetch = 0 : i64, scratch_operands = 0 : i64, tpu.core_type = #tpu.core_type<tc>, window_params = [{pipeline_mode = #tpu.pipeline_mode<synchronous>, transform_indices = @transform_0, window_bounds = array<i64: 26, 8, 256>}, {pipeline_mode = #tpu.pipeline_mode<synchronous>, transform_indices = @transform_1, window_bounds = array<i64: 8, 1>}, {pipeline_mode = #tpu.pipeline_mode<synchronous>, transform_indices = @transform_2, window_bounds = array<i64: 8, 256>}, {transform_indices = @transform_3, window_bounds = array<i64: 4, 256>}, {transform_indices = @transform_4, window_bounds = array<i64: 8, 256>}]} {
    %c0 = arith.constant 0 : index
    %c0_0 = arith.constant 0 : index
    %0 = vector.load %arg4[%c0, %c0_0] : memref<4x256xf32, #tpu.memory_space<vmem>>, vector<4x256xf32>
    %c0_1 = arith.constant 0 : index
    %c0_2 = arith.constant 0 : index
    %1 = vector.load %arg2[%c0_1, %c0_2] : memref<8x1xf32, #tpu.memory_space<vmem>>, vector<8x1xf32>
    %2 = vector.shape_cast %1 : vector<8x1xf32> to vector<8x1xf32>
    %3 = vector.broadcast %2 : vector<8x1xf32> to vector<8x256xf32>
    %cst = arith.constant 0.000000e+00 : f32
    %4 = vector.broadcast %cst : f32 to vector<8x256xf32>
    %cst_3 = arith.constant 0.000000e+00 : f32
    %5 = vector.broadcast %cst_3 : f32 to vector<8x256xf32>
    %cst_4 = arith.constant 0.000000e+00 : f32
    %6 = vector.broadcast %cst_4 : f32 to vector<8x256xf32>
    %c17_i32 = arith.constant 17 : i32
    %7 = tpu.dynamic_rotate %0 by %c17_i32 dim 1 : vector<4x256xf32>, i32 -> vector<4x256xf32>
    %c0_5 = arith.constant 0 : index
    %c0_6 = arith.constant 0 : index
    %8 = vector.load %arg3[%c0_5, %c0_6] : memref<8x256xf32, #tpu.memory_space<vmem>>, vector<1x256xf32>
    %9 = vector.extract_strided_slice %7 {offsets = [0, 0], sizes = [1, 256], strides = [1, 1]} : vector<4x256xf32> to vector<1x256xf32>
    %10 = arith.mulf %9, %8 : vector<1x256xf32>
    %c0_7 = arith.constant 0 : index
    %c0_8 = arith.constant 0 : index
    %c0_9 = arith.constant 0 : index
    %11 = vector.load %arg1[%c0_7, %c0_8, %c0_9] : memref<26x8x256xf32, #tpu.memory_space<vmem>>, vector<1x8x256xf32>
    %12 = vector.shape_cast %11 : vector<1x8x256xf32> to vector<8x256xf32>
    %13 = vector.broadcast %10 : vector<1x256xf32> to vector<8x256xf32>
    %14 = arith.mulf %12, %13 : vector<8x256xf32>
    %15 = arith.addf %3, %14 : vector<8x256xf32>
    %16 = vector.extract_strided_slice %7 {offsets = [1, 0], sizes = [1, 256], strides = [1, 1]} : vector<4x256xf32> to vector<1x256xf32>
    %17 = arith.mulf %16, %8 : vector<1x256xf32>
    %c1 = arith.constant 1 : index
    %c0_10 = arith.constant 0 : index
    %c0_11 = arith.constant 0 : index
    %18 = vector.load %arg1[%c1, %c0_10, %c0_11] : memref<26x8x256xf32, #tpu.memory_space<vmem>>, vector<1x8x256xf32>
    %19 = vector.shape_cast %18 : vector<1x8x256xf32> to vector<8x256xf32>
    %20 = vector.broadcast %17 : vector<1x256xf32> to vector<8x256xf32>
    %21 = arith.mulf %19, %20 : vector<8x256xf32>
    %22 = arith.addf %4, %21 : vector<8x256xf32>
    %23 = vector.extract_strided_slice %7 {offsets = [2, 0], sizes = [1, 256], strides = [1, 1]} : vector<4x256xf32> to vector<1x256xf32>
    %24 = arith.mulf %23, %8 : vector<1x256xf32>
    %c2 = arith.constant 2 : index
    %c0_12 = arith.constant 0 : index
    %c0_13 = arith.constant 0 : index
    %25 = vector.load %arg1[%c2, %c0_12, %c0_13] : memref<26x8x256xf32, #tpu.memory_space<vmem>>, vector<1x8x256xf32>
    %26 = vector.shape_cast %25 : vector<1x8x256xf32> to vector<8x256xf32>
    %27 = vector.broadcast %24 : vector<1x256xf32> to vector<8x256xf32>
    %28 = arith.mulf %26, %27 : vector<8x256xf32>
    %29 = arith.addf %5, %28 : vector<8x256xf32>
    %30 = vector.extract_strided_slice %7 {offsets = [3, 0], sizes = [1, 256], strides = [1, 1]} : vector<4x256xf32> to vector<1x256xf32>
    %31 = arith.mulf %30, %8 : vector<1x256xf32>
    %c3 = arith.constant 3 : index
    %c0_14 = arith.constant 0 : index
    %c0_15 = arith.constant 0 : index
    %32 = vector.load %arg1[%c3, %c0_14, %c0_15] : memref<26x8x256xf32, #tpu.memory_space<vmem>>, vector<1x8x256xf32>
    %33 = vector.shape_cast %32 : vector<1x8x256xf32> to vector<8x256xf32>
    %34 = vector.broadcast %31 : vector<1x256xf32> to vector<8x256xf32>
    %35 = arith.mulf %33, %34 : vector<8x256xf32>
    %36 = arith.addf %6, %35 : vector<8x256xf32>
    %c16_i32 = arith.constant 16 : i32
    %37 = tpu.dynamic_rotate %0 by %c16_i32 dim 1 : vector<4x256xf32>, i32 -> vector<4x256xf32>
    %c1_16 = arith.constant 1 : index
    %c0_17 = arith.constant 0 : index
    %38 = vector.load %arg3[%c1_16, %c0_17] : memref<8x256xf32, #tpu.memory_space<vmem>>, vector<1x256xf32>
    %39 = vector.extract_strided_slice %37 {offsets = [0, 0], sizes = [1, 256], strides = [1, 1]} : vector<4x256xf32> to vector<1x256xf32>
    %40 = arith.mulf %39, %38 : vector<1x256xf32>
    %c4 = arith.constant 4 : index
    %c0_18 = arith.constant 0 : index
    %c0_19 = arith.constant 0 : index
    %41 = vector.load %arg1[%c4, %c0_18, %c0_19] : memref<26x8x256xf32, #tpu.memory_space<vmem>>, vector<1x8x256xf32>
    %42 = vector.shape_cast %41 : vector<1x8x256xf32> to vector<8x256xf32>
    %43 = vector.broadcast %40 : vector<1x256xf32> to vector<8x256xf32>
    %44 = arith.mulf %42, %43 : vector<8x256xf32>
    %45 = arith.addf %15, %44 : vector<8x256xf32>
    %46 = vector.extract_strided_slice %37 {offsets = [1, 0], sizes = [1, 256], strides = [1, 1]} : vector<4x256xf32> to vector<1x256xf32>
    %47 = arith.mulf %46, %38 : vector<1x256xf32>
    %c5 = arith.constant 5 : index
    %c0_20 = arith.constant 0 : index
    %c0_21 = arith.constant 0 : index
    %48 = vector.load %arg1[%c5, %c0_20, %c0_21] : memref<26x8x256xf32, #tpu.memory_space<vmem>>, vector<1x8x256xf32>
    %49 = vector.shape_cast %48 : vector<1x8x256xf32> to vector<8x256xf32>
    %50 = vector.broadcast %47 : vector<1x256xf32> to vector<8x256xf32>
    %51 = arith.mulf %49, %50 : vector<8x256xf32>
    %52 = arith.addf %22, %51 : vector<8x256xf32>
    %53 = vector.extract_strided_slice %37 {offsets = [2, 0], sizes = [1, 256], strides = [1, 1]} : vector<4x256xf32> to vector<1x256xf32>
    %54 = arith.mulf %53, %38 : vector<1x256xf32>
    %c6 = arith.constant 6 : index
    %c0_22 = arith.constant 0 : index
    %c0_23 = arith.constant 0 : index
    %55 = vector.load %arg1[%c6, %c0_22, %c0_23] : memref<26x8x256xf32, #tpu.memory_space<vmem>>, vector<1x8x256xf32>
    %56 = vector.shape_cast %55 : vector<1x8x256xf32> to vector<8x256xf32>
    %57 = vector.broadcast %54 : vector<1x256xf32> to vector<8x256xf32>
    %58 = arith.mulf %56, %57 : vector<8x256xf32>
    %59 = arith.addf %29, %58 : vector<8x256xf32>
    %60 = vector.extract_strided_slice %37 {offsets = [3, 0], sizes = [1, 256], strides = [1, 1]} : vector<4x256xf32> to vector<1x256xf32>
    %61 = arith.mulf %60, %38 : vector<1x256xf32>
    %c7 = arith.constant 7 : index
    %c0_24 = arith.constant 0 : index
    %c0_25 = arith.constant 0 : index
    %62 = vector.load %arg1[%c7, %c0_24, %c0_25] : memref<26x8x256xf32, #tpu.memory_space<vmem>>, vector<1x8x256xf32>
    %63 = vector.shape_cast %62 : vector<1x8x256xf32> to vector<8x256xf32>
    %64 = vector.broadcast %61 : vector<1x256xf32> to vector<8x256xf32>
    %65 = arith.mulf %63, %64 : vector<8x256xf32>
    %66 = arith.addf %36, %65 : vector<8x256xf32>
    %c15_i32 = arith.constant 15 : i32
    %67 = tpu.dynamic_rotate %0 by %c15_i32 dim 1 : vector<4x256xf32>, i32 -> vector<4x256xf32>
    %c2_26 = arith.constant 2 : index
    %c0_27 = arith.constant 0 : index
    %68 = vector.load %arg3[%c2_26, %c0_27] : memref<8x256xf32, #tpu.memory_space<vmem>>, vector<1x256xf32>
    %69 = vector.extract_strided_slice %67 {offsets = [0, 0], sizes = [1, 256], strides = [1, 1]} : vector<4x256xf32> to vector<1x256xf32>
    %70 = arith.mulf %69, %68 : vector<1x256xf32>
    %c8 = arith.constant 8 : index
    %c0_28 = arith.constant 0 : index
    %c0_29 = arith.constant 0 : index
    %71 = vector.load %arg1[%c8, %c0_28, %c0_29] : memref<26x8x256xf32, #tpu.memory_space<vmem>>, vector<1x8x256xf32>
    %72 = vector.shape_cast %71 : vector<1x8x256xf32> to vector<8x256xf32>
    %73 = vector.broadcast %70 : vector<1x256xf32> to vector<8x256xf32>
    %74 = arith.mulf %72, %73 : vector<8x256xf32>
    %75 = arith.addf %45, %74 : vector<8x256xf32>
    %76 = vector.extract_strided_slice %67 {offsets = [1, 0], sizes = [1, 256], strides = [1, 1]} : vector<4x256xf32> to vector<1x256xf32>
    %77 = arith.mulf %76, %68 : vector<1x256xf32>
    %c9 = arith.constant 9 : index
    %c0_30 = arith.constant 0 : index
    %c0_31 = arith.constant 0 : index
    %78 = vector.load %arg1[%c9, %c0_30, %c0_31] : memref<26x8x256xf32, #tpu.memory_space<vmem>>, vector<1x8x256xf32>
    %79 = vector.shape_cast %78 : vector<1x8x256xf32> to vector<8x256xf32>
    %80 = vector.broadcast %77 : vector<1x256xf32> to vector<8x256xf32>
    %81 = arith.mulf %79, %80 : vector<8x256xf32>
    %82 = arith.addf %52, %81 : vector<8x256xf32>
    %83 = vector.extract_strided_slice %67 {offsets = [2, 0], sizes = [1, 256], strides = [1, 1]} : vector<4x256xf32> to vector<1x256xf32>
    %84 = arith.mulf %83, %68 : vector<1x256xf32>
    %c10 = arith.constant 10 : index
    %c0_32 = arith.constant 0 : index
    %c0_33 = arith.constant 0 : index
    %85 = vector.load %arg1[%c10, %c0_32, %c0_33] : memref<26x8x256xf32, #tpu.memory_space<vmem>>, vector<1x8x256xf32>
    %86 = vector.shape_cast %85 : vector<1x8x256xf32> to vector<8x256xf32>
    %87 = vector.broadcast %84 : vector<1x256xf32> to vector<8x256xf32>
    %88 = arith.mulf %86, %87 : vector<8x256xf32>
    %89 = arith.addf %59, %88 : vector<8x256xf32>
    %90 = vector.extract_strided_slice %67 {offsets = [3, 0], sizes = [1, 256], strides = [1, 1]} : vector<4x256xf32> to vector<1x256xf32>
    %91 = arith.mulf %90, %68 : vector<1x256xf32>
    %c11 = arith.constant 11 : index
    %c0_34 = arith.constant 0 : index
    %c0_35 = arith.constant 0 : index
    %92 = vector.load %arg1[%c11, %c0_34, %c0_35] : memref<26x8x256xf32, #tpu.memory_space<vmem>>, vector<1x8x256xf32>
    %93 = vector.shape_cast %92 : vector<1x8x256xf32> to vector<8x256xf32>
    %94 = vector.broadcast %91 : vector<1x256xf32> to vector<8x256xf32>
    %95 = arith.mulf %93, %94 : vector<8x256xf32>
    %96 = arith.addf %66, %95 : vector<8x256xf32>
    %c1_i32 = arith.constant 1 : i32
    %97 = tpu.dynamic_rotate %0 by %c1_i32 dim 1 : vector<4x256xf32>, i32 -> vector<4x256xf32>
    %c3_36 = arith.constant 3 : index
    %c0_37 = arith.constant 0 : index
    %98 = vector.load %arg3[%c3_36, %c0_37] : memref<8x256xf32, #tpu.memory_space<vmem>>, vector<1x256xf32>
    %99 = vector.extract_strided_slice %97 {offsets = [0, 0], sizes = [1, 256], strides = [1, 1]} : vector<4x256xf32> to vector<1x256xf32>
    %100 = arith.mulf %99, %98 : vector<1x256xf32>
    %c12 = arith.constant 12 : index
    %c0_38 = arith.constant 0 : index
    %c0_39 = arith.constant 0 : index
    %101 = vector.load %arg1[%c12, %c0_38, %c0_39] : memref<26x8x256xf32, #tpu.memory_space<vmem>>, vector<1x8x256xf32>
    %102 = vector.shape_cast %101 : vector<1x8x256xf32> to vector<8x256xf32>
    %103 = vector.broadcast %100 : vector<1x256xf32> to vector<8x256xf32>
    %104 = arith.mulf %102, %103 : vector<8x256xf32>
    %105 = arith.addf %75, %104 : vector<8x256xf32>
    %106 = vector.extract_strided_slice %97 {offsets = [1, 0], sizes = [1, 256], strides = [1, 1]} : vector<4x256xf32> to vector<1x256xf32>
    %107 = arith.mulf %106, %98 : vector<1x256xf32>
    %c13 = arith.constant 13 : index
    %c0_40 = arith.constant 0 : index
    %c0_41 = arith.constant 0 : index
    %108 = vector.load %arg1[%c13, %c0_40, %c0_41] : memref<26x8x256xf32, #tpu.memory_space<vmem>>, vector<1x8x256xf32>
    %109 = vector.shape_cast %108 : vector<1x8x256xf32> to vector<8x256xf32>
    %110 = vector.broadcast %107 : vector<1x256xf32> to vector<8x256xf32>
    %111 = arith.mulf %109, %110 : vector<8x256xf32>
    %112 = arith.addf %82, %111 : vector<8x256xf32>
    %113 = vector.extract_strided_slice %97 {offsets = [2, 0], sizes = [1, 256], strides = [1, 1]} : vector<4x256xf32> to vector<1x256xf32>
    %114 = arith.mulf %113, %98 : vector<1x256xf32>
    %c14 = arith.constant 14 : index
    %c0_42 = arith.constant 0 : index
    %c0_43 = arith.constant 0 : index
    %115 = vector.load %arg1[%c14, %c0_42, %c0_43] : memref<26x8x256xf32, #tpu.memory_space<vmem>>, vector<1x8x256xf32>
    %116 = vector.shape_cast %115 : vector<1x8x256xf32> to vector<8x256xf32>
    %117 = vector.broadcast %114 : vector<1x256xf32> to vector<8x256xf32>
    %118 = arith.mulf %116, %117 : vector<8x256xf32>
    %119 = arith.addf %89, %118 : vector<8x256xf32>
    %120 = vector.extract_strided_slice %97 {offsets = [3, 0], sizes = [1, 256], strides = [1, 1]} : vector<4x256xf32> to vector<1x256xf32>
    %121 = arith.mulf %120, %98 : vector<1x256xf32>
    %c15 = arith.constant 15 : index
    %c0_44 = arith.constant 0 : index
    %c0_45 = arith.constant 0 : index
    %122 = vector.load %arg1[%c15, %c0_44, %c0_45] : memref<26x8x256xf32, #tpu.memory_space<vmem>>, vector<1x8x256xf32>
    %123 = vector.shape_cast %122 : vector<1x8x256xf32> to vector<8x256xf32>
    %124 = vector.broadcast %121 : vector<1x256xf32> to vector<8x256xf32>
    %125 = arith.mulf %123, %124 : vector<8x256xf32>
    %126 = arith.addf %96, %125 : vector<8x256xf32>
    %127 = vector.extract_strided_slice %0 {offsets = [2, 0], sizes = [1, 256], strides = [1, 1]} : vector<4x256xf32> to vector<1x256xf32>
    %c16 = arith.constant 16 : index
    %c0_46 = arith.constant 0 : index
    %c0_47 = arith.constant 0 : index
    %128 = vector.load %arg1[%c16, %c0_46, %c0_47] : memref<26x8x256xf32, #tpu.memory_space<vmem>>, vector<1x8x256xf32>
    %129 = vector.shape_cast %128 : vector<1x8x256xf32> to vector<8x256xf32>
    %130 = vector.broadcast %127 : vector<1x256xf32> to vector<8x256xf32>
    %131 = arith.mulf %129, %130 : vector<8x256xf32>
    %132 = arith.addf %105, %131 : vector<8x256xf32>
    %133 = vector.extract_strided_slice %0 {offsets = [3, 0], sizes = [1, 256], strides = [1, 1]} : vector<4x256xf32> to vector<1x256xf32>
    %c17 = arith.constant 17 : index
    %c0_48 = arith.constant 0 : index
    %c0_49 = arith.constant 0 : index
    %134 = vector.load %arg1[%c17, %c0_48, %c0_49] : memref<26x8x256xf32, #tpu.memory_space<vmem>>, vector<1x8x256xf32>
    %135 = vector.shape_cast %134 : vector<1x8x256xf32> to vector<8x256xf32>
    %136 = vector.broadcast %133 : vector<1x256xf32> to vector<8x256xf32>
    %137 = arith.mulf %135, %136 : vector<8x256xf32>
    %138 = arith.addf %112, %137 : vector<8x256xf32>
    %c255_i32 = arith.constant 255 : i32
    %139 = tpu.dynamic_rotate %0 by %c255_i32 dim 1 : vector<4x256xf32>, i32 -> vector<4x256xf32>
    %c4_50 = arith.constant 4 : index
    %c0_51 = arith.constant 0 : index
    %140 = vector.load %arg3[%c4_50, %c0_51] : memref<8x256xf32, #tpu.memory_space<vmem>>, vector<1x256xf32>
    %141 = vector.extract_strided_slice %139 {offsets = [2, 0], sizes = [1, 256], strides = [1, 1]} : vector<4x256xf32> to vector<1x256xf32>
    %142 = arith.mulf %141, %140 : vector<1x256xf32>
    %c18 = arith.constant 18 : index
    %c0_52 = arith.constant 0 : index
    %c0_53 = arith.constant 0 : index
    %143 = vector.load %arg1[%c18, %c0_52, %c0_53] : memref<26x8x256xf32, #tpu.memory_space<vmem>>, vector<1x8x256xf32>
    %144 = vector.shape_cast %143 : vector<1x8x256xf32> to vector<8x256xf32>
    %145 = vector.broadcast %142 : vector<1x256xf32> to vector<8x256xf32>
    %146 = arith.mulf %144, %145 : vector<8x256xf32>
    %147 = arith.addf %119, %146 : vector<8x256xf32>
    %148 = vector.extract_strided_slice %139 {offsets = [3, 0], sizes = [1, 256], strides = [1, 1]} : vector<4x256xf32> to vector<1x256xf32>
    %149 = arith.mulf %148, %140 : vector<1x256xf32>
    %c19 = arith.constant 19 : index
    %c0_54 = arith.constant 0 : index
    %c0_55 = arith.constant 0 : index
    %150 = vector.load %arg1[%c19, %c0_54, %c0_55] : memref<26x8x256xf32, #tpu.memory_space<vmem>>, vector<1x8x256xf32>
    %151 = vector.shape_cast %150 : vector<1x8x256xf32> to vector<8x256xf32>
    %152 = vector.broadcast %149 : vector<1x256xf32> to vector<8x256xf32>
    %153 = arith.mulf %151, %152 : vector<8x256xf32>
    %154 = arith.addf %126, %153 : vector<8x256xf32>
    %c241_i32 = arith.constant 241 : i32
    %155 = tpu.dynamic_rotate %0 by %c241_i32 dim 1 : vector<4x256xf32>, i32 -> vector<4x256xf32>
    %c5_56 = arith.constant 5 : index
    %c0_57 = arith.constant 0 : index
    %156 = vector.load %arg3[%c5_56, %c0_57] : memref<8x256xf32, #tpu.memory_space<vmem>>, vector<1x256xf32>
    %157 = vector.extract_strided_slice %155 {offsets = [2, 0], sizes = [1, 256], strides = [1, 1]} : vector<4x256xf32> to vector<1x256xf32>
    %158 = arith.mulf %157, %156 : vector<1x256xf32>
    %c20 = arith.constant 20 : index
    %c0_58 = arith.constant 0 : index
    %c0_59 = arith.constant 0 : index
    %159 = vector.load %arg1[%c20, %c0_58, %c0_59] : memref<26x8x256xf32, #tpu.memory_space<vmem>>, vector<1x8x256xf32>
    %160 = vector.shape_cast %159 : vector<1x8x256xf32> to vector<8x256xf32>
    %161 = vector.broadcast %158 : vector<1x256xf32> to vector<8x256xf32>
    %162 = arith.mulf %160, %161 : vector<8x256xf32>
    %163 = arith.addf %132, %162 : vector<8x256xf32>
    %164 = vector.extract_strided_slice %155 {offsets = [3, 0], sizes = [1, 256], strides = [1, 1]} : vector<4x256xf32> to vector<1x256xf32>
    %165 = arith.mulf %164, %156 : vector<1x256xf32>
    %c21 = arith.constant 21 : index
    %c0_60 = arith.constant 0 : index
    %c0_61 = arith.constant 0 : index
    %166 = vector.load %arg1[%c21, %c0_60, %c0_61] : memref<26x8x256xf32, #tpu.memory_space<vmem>>, vector<1x8x256xf32>
    %167 = vector.shape_cast %166 : vector<1x8x256xf32> to vector<8x256xf32>
    %168 = vector.broadcast %165 : vector<1x256xf32> to vector<8x256xf32>
    %169 = arith.mulf %167, %168 : vector<8x256xf32>
    %170 = arith.addf %138, %169 : vector<8x256xf32>
    %c240_i32 = arith.constant 240 : i32
    %171 = tpu.dynamic_rotate %0 by %c240_i32 dim 1 : vector<4x256xf32>, i32 -> vector<4x256xf32>
    %c6_62 = arith.constant 6 : index
    %c0_63 = arith.constant 0 : index
    %172 = vector.load %arg3[%c6_62, %c0_63] : memref<8x256xf32, #tpu.memory_space<vmem>>, vector<1x256xf32>
    %173 = vector.extract_strided_slice %171 {offsets = [2, 0], sizes = [1, 256], strides = [1, 1]} : vector<4x256xf32> to vector<1x256xf32>
    %174 = arith.mulf %173, %172 : vector<1x256xf32>
    %c22 = arith.constant 22 : index
    %c0_64 = arith.constant 0 : index
    %c0_65 = arith.constant 0 : index
    %175 = vector.load %arg1[%c22, %c0_64, %c0_65] : memref<26x8x256xf32, #tpu.memory_space<vmem>>, vector<1x8x256xf32>
    %176 = vector.shape_cast %175 : vector<1x8x256xf32> to vector<8x256xf32>
    %177 = vector.broadcast %174 : vector<1x256xf32> to vector<8x256xf32>
    %178 = arith.mulf %176, %177 : vector<8x256xf32>
    %179 = arith.addf %147, %178 : vector<8x256xf32>
    %180 = vector.extract_strided_slice %171 {offsets = [3, 0], sizes = [1, 256], strides = [1, 1]} : vector<4x256xf32> to vector<1x256xf32>
    %181 = arith.mulf %180, %172 : vector<1x256xf32>
    %c23 = arith.constant 23 : index
    %c0_66 = arith.constant 0 : index
    %c0_67 = arith.constant 0 : index
    %182 = vector.load %arg1[%c23, %c0_66, %c0_67] : memref<26x8x256xf32, #tpu.memory_space<vmem>>, vector<1x8x256xf32>
    %183 = vector.shape_cast %182 : vector<1x8x256xf32> to vector<8x256xf32>
    %184 = vector.broadcast %181 : vector<1x256xf32> to vector<8x256xf32>
    %185 = arith.mulf %183, %184 : vector<8x256xf32>
    %186 = arith.addf %154, %185 : vector<8x256xf32>
    %c239_i32 = arith.constant 239 : i32
    %187 = tpu.dynamic_rotate %0 by %c239_i32 dim 1 : vector<4x256xf32>, i32 -> vector<4x256xf32>
    %c7_68 = arith.constant 7 : index
    %c0_69 = arith.constant 0 : index
    %188 = vector.load %arg3[%c7_68, %c0_69] : memref<8x256xf32, #tpu.memory_space<vmem>>, vector<1x256xf32>
    %189 = vector.extract_strided_slice %187 {offsets = [2, 0], sizes = [1, 256], strides = [1, 1]} : vector<4x256xf32> to vector<1x256xf32>
    %190 = arith.mulf %189, %188 : vector<1x256xf32>
    %c24 = arith.constant 24 : index
    %c0_70 = arith.constant 0 : index
    %c0_71 = arith.constant 0 : index
    %191 = vector.load %arg1[%c24, %c0_70, %c0_71] : memref<26x8x256xf32, #tpu.memory_space<vmem>>, vector<1x8x256xf32>
    %192 = vector.shape_cast %191 : vector<1x8x256xf32> to vector<8x256xf32>
    %193 = vector.broadcast %190 : vector<1x256xf32> to vector<8x256xf32>
    %194 = arith.mulf %192, %193 : vector<8x256xf32>
    %195 = arith.addf %163, %194 : vector<8x256xf32>
    %196 = vector.extract_strided_slice %187 {offsets = [3, 0], sizes = [1, 256], strides = [1, 1]} : vector<4x256xf32> to vector<1x256xf32>
    %197 = arith.mulf %196, %188 : vector<1x256xf32>
    %c25 = arith.constant 25 : index
    %c0_72 = arith.constant 0 : index
    %c0_73 = arith.constant 0 : index
    %198 = vector.load %arg1[%c25, %c0_72, %c0_73] : memref<26x8x256xf32, #tpu.memory_space<vmem>>, vector<1x8x256xf32>
    %199 = vector.shape_cast %198 : vector<1x8x256xf32> to vector<8x256xf32>
    %200 = vector.broadcast %197 : vector<1x256xf32> to vector<8x256xf32>
    %201 = arith.mulf %199, %200 : vector<8x256xf32>
    %202 = arith.addf %170, %201 : vector<8x256xf32>
    %203 = arith.addf %195, %202 : vector<8x256xf32>
    %204 = arith.addf %203, %179 : vector<8x256xf32>
    %205 = arith.addf %204, %186 : vector<8x256xf32>
    %cst_74 = arith.constant 0.000000e+00 : f32
    %206 = vector.broadcast %cst_74 : f32 to vector<8x256xf32>
    %207 = arith.cmpf ogt, %205, %206 : vector<8x256xf32>
    %208 = math.exp %205 : vector<8x256xf32>
    %cst_75 = arith.constant 1.000000e+00 : f32
    %209 = vector.broadcast %cst_75 : f32 to vector<8x256xf32>
    %210 = arith.subf %208, %209 : vector<8x256xf32>
    %211 = arith.select %207, %205, %210 : vector<8x256xi1>, vector<8x256xf32>
    %c0_76 = arith.constant 0 : index
    %c0_77 = arith.constant 0 : index
    %212 = vector.load %arg5[%c0_76, %c0_77] : memref<8x256xf32, #tpu.memory_space<vmem>>, vector<8x256xf32>
    tpu.vector_store %arg5[%c0_76, %c0_77], %211 {strides = array<i32>} : memref<8x256xf32, #tpu.memory_space<vmem>>, vector<8x256xf32>,
    return
  }
  func.func @transform_0(%arg0: i32) -> (i32, i32, i32) {
    %c0_i32 = arith.constant 0 : i32
    %c0_i32_0 = arith.constant 0 : i32
    %c0_i32_1 = arith.constant 0 : i32
    %c0_i32_2 = arith.constant 0 : i32
    return %c0_i32, %c0_i32_0, %c0_i32_1 : i32, i32, i32
  }
  func.func @transform_1(%arg0: i32) -> (i32, i32) {
    %c0_i32 = arith.constant 0 : i32
    %c0_i32_0 = arith.constant 0 : i32
    %c0_i32_1 = arith.constant 0 : i32
    return %c0_i32, %c0_i32_0 : i32, i32
  }
  func.func @transform_2(%arg0: i32) -> (i32, i32) {
    %c0_i32 = arith.constant 0 : i32
    %c0_i32_0 = arith.constant 0 : i32
    %c0_i32_1 = arith.constant 0 : i32
    return %c0_i32, %c0_i32_0 : i32, i32
  }
  func.func @transform_3(%arg0: i32) -> (i32, i32) {
    %c0_i32 = arith.constant 0 : i32
    %c0_i32_0 = arith.constant 0 : i32
    return %c0_i32, %arg0 : i32, i32
  }
  func.func @transform_4(%arg0: i32) -> (i32, i32) {
    %c0_i32 = arith.constant 0 : i32
    %c0_i32_0 = arith.constant 0 : i32
    return %c0_i32, %arg0 : i32, i32
  }
}

</mosaic_0001>

<llo_original>
// kernel: tpu_custom_call.1
$region0: #{tpu_custom_call.1}
  #allocation0 [shape = 'u32[]', space=smem, size = 0x4, offset = 0x4, fixed_abs, tag = 'smem constant byte address 0x4 - core index']
  #allocation1 [shape = 'u32[144,128]{1,0:T(1,128)}', space=vmem, size = 0x12000, scoped, tag = 'internal scratch']
  %s0 = inlined_call_operand.hbm [shape: f32[26,8,256], index: 0, kind: input, shape index: {}]
  %s1 = inlined_call_operand.vmem [shape: f32[8,1], index: 1, kind: input, shape index: {}]
  %s2 = inlined_call_operand.hbm [shape: f32[8,256], index: 2, kind: input, shape index: {}]
  %s3 = inlined_call_operand.hbm [shape: f32[4,512], index: 3, kind: input, shape index: {}]
  %s4 = inlined_call_operand.hbm [shape: f32[8,512], index: 4, kind: output, shape index: {}]
  %s5 = sld [smem:[#allocation0]]
  $region61: #{tpu_custom_call.1} parent=0
    _
  %s7 = ssub.s32 1, %s5
  %s8 = scalar_select 0, %s7, %s5
  $region1: #{tpu_custom_call.1} parent=0
    #allocation2 [shape = 'u8[212992]{0}', space=vmem, size = 0x34000, scoped, tag = 'input window, operand 0, single buffered']
    #allocation3 [shape = 's32[2]{0}', space=sflag, size = 0x8, scoped, tag = 'scoped memory for tpu_custom_call.1']
    #allocation4 [shape = 's32[2]{0}', space=sflag, size = 0x8, scoped, tag = 'scoped memory for tpu_custom_call.1']
    #allocation5 [shape = 'u8[8192]{0}', space=vmem, size = 0x2000, scoped, tag = 'input window, operand 2, single buffered']
    #allocation6 [shape = 's32[1]{0}', space=sflag, size = 0x4, scoped, tag = 'scoped memory for tpu_custom_call.1']
    #allocation7 [shape = 'u8[8192]{0}', space=vmem, size = 0x2000, scoped, tag = 'input window, operand 3']
    #allocation8 [shape = 'u8[16384]{0}', space=vmem, size = 0x4000, scoped, tag = 'output window, operand 0']
    %9 = vsyncpa [#allocation3], 0
    %10 = vsyncpa [#allocation6], 0
    %11 = vsyncpa [#allocation4], 0
    %s12 = scalar_lea.sflag [#allocation4], 1
    %13 = vsyncpa %s12, 0
    loop: start=0, step=1, limit=4
    $region2: #{tpu_custom_call.1} parent=1 // loop_pre_header
      _
    $region3: #{tpu_custom_call.1} parent=1 // loop_header
      %s15 = sphi 0, %s19
      %p16 = scmp.ge.s32.totalorder %s15, 4
      %s23 = sphi 0, %s23
      %s25 = sphi 0, %s23
      %s26 = sphi 0, %s25
      %s40 = sphi 0, %s26
      %s44 = sphi 0, %s44
      %s46 = sphi 0, %s44
      %s47 = sphi 0, %s46
      %s61 = sphi 0, %s47
      %s65 = sphi 0, %s65
      %s67 = sphi 0, %s65
      %s68 = sphi 0, %s67
      %s82 = sphi 0, %s68
      %s88 = sphi 0, %s90
      %s91 = sphi 0, %s88
      %s92 = sphi 0, %s91
      %s108 = sphi 0, %s92
      %s114 = sphi 0, %s116
      %s117 = sphi 0, %s114
      %s118 = sphi 0, %s117
      %s134 = sphi 0, %s118
    $region4: #{tpu_custom_call.1} parent=1 // loop_header_branch
      %18 = sbr.rel (%p16) target = $region8
    $region5: #{tpu_custom_call.1} parent=1 // loop_body
      %s20 = ssub.s32 %s15, 1
      %s21 = ssub.s32 %s15, 2
      %s22 = sadd.s32 %s15, 1
      %s24 = sadd.s32 %s23, 1
      %p27 = scmp.eq.s32.totalorder %s15, 1
      %p28 = scmp.ne.s32.totalorder %s23, %s25
      %p29 = scmp.eq.s32.totalorder %s15, 0
      %p30 = por %p28, %p29
      %p31 = scmp.ne.s32.totalorder %s23, %s25
      %p32 = scmp.eq.s32.totalorder %s20, 1
      %p33 = por %p31, %p32
      %p34 = scmp.ne.s32.totalorder %s25, %s26
      %p35 = scmp.eq.s32.totalorder %s20, 0
      %p36 = por %p34, %p35
      %p37 = scmp.ne.s32.totalorder %s25, %s26
      %p38 = scmp.eq.s32.totalorder %s21, 1
      %p39 = por %p37, %p38
      %p41 = scmp.ne.s32.totalorder %s26, %s40
      %p42 = scmp.eq.s32.totalorder %s21, 0
      %p43 = por %p41, %p42
      %s45 = sadd.s32 %s44, 1
      %p48 = scmp.eq.s32.totalorder %s15, 1
      %p49 = scmp.ne.s32.totalorder %s44, %s46
      %p50 = scmp.eq.s32.totalorder %s15, 0
      %p51 = por %p49, %p50
      %p52 = scmp.ne.s32.totalorder %s44, %s46
      %p53 = scmp.eq.s32.totalorder %s20, 1
      %p54 = por %p52, %p53
      %p55 = scmp.ne.s32.totalorder %s46, %s47
      %p56 = scmp.eq.s32.totalorder %s20, 0
      %p57 = por %p55, %p56
      %p58 = scmp.ne.s32.totalorder %s46, %s47
      %p59 = scmp.eq.s32.totalorder %s21, 1
      %p60 = por %p58, %p59
      %p62 = scmp.ne.s32.totalorder %s47, %s61
      %p63 = scmp.eq.s32.totalorder %s21, 0
      %p64 = por %p62, %p63
      %s66 = sadd.s32 %s65, 1
      %p69 = scmp.eq.s32.totalorder %s15, 1
      %p70 = scmp.ne.s32.totalorder %s65, %s67
      %p71 = scmp.eq.s32.totalorder %s15, 0
      %p72 = por %p70, %p71
      %p73 = scmp.ne.s32.totalorder %s65, %s67
      %p74 = scmp.eq.s32.totalorder %s20, 1
      %p75 = por %p73, %p74
      %p76 = scmp.ne.s32.totalorder %s67, %s68
      %p77 = scmp.eq.s32.totalorder %s20, 0
      %p78 = por %p76, %p77
      %p79 = scmp.ne.s32.totalorder %s67, %s68
      %p80 = scmp.eq.s32.totalorder %s21, 1
      %p81 = por %p79, %p80
      %p83 = scmp.ne.s32.totalorder %s68, %s82
      %p84 = scmp.eq.s32.totalorder %s21, 0
      %p85 = por %p83, %p84
      %s86 = ssub.s32 %s15, %s22
      %p87 = scmp.eq.s32.totalorder %s86, 0
      %s89 = sadd.s32 %s88, 1
      %s90 = scalar_select %p87, %s88, %s89
      %p93 = pneg %p87
      %p94 = scmp.eq.s32.totalorder %s15, 1
      %p95 = por %p93, %p94
      %p96 = scmp.ne.s32.totalorder %s88, %s91
      %p97 = scmp.eq.s32.totalorder %s15, 0
      %p98 = por %p96, %p97
      %p99 = scmp.ne.s32.totalorder %s88, %s91
      %p100 = scmp.eq.s32.totalorder %s20, 1
      %p101 = por %p99, %p100
      %p102 = scmp.ne.s32.totalorder %s91, %s92
      %p103 = scmp.eq.s32.totalorder %s20, 0
      %p104 = por %p102, %p103
      %p105 = scmp.ne.s32.totalorder %s91, %s92
      %p106 = scmp.eq.s32.totalorder %s21, 1
      %p107 = por %p105, %p106
      %p109 = scmp.ne.s32.totalorder %s92, %s108
      %p110 = scmp.eq.s32.totalorder %s21, 0
      %p111 = por %p109, %p110
      %s112 = ssub.s32 %s15, %s22
      %p113 = scmp.eq.s32.totalorder %s112, 0
      %s115 = sadd.s32 %s114, 1
      %s116 = scalar_select %p113, %s114, %s115
      %p119 = pneg %p113
      %p120 = scmp.eq.s32.totalorder %s15, 1
      %p121 = por %p119, %p120
      %p122 = scmp.ne.s32.totalorder %s114, %s117
      %p123 = scmp.eq.s32.totalorder %s15, 0
      %p124 = por %p122, %p123
      %p125 = scmp.ne.s32.totalorder %s114, %s117
      %p126 = scmp.eq.s32.totalorder %s20, 1
      %p127 = por %p125, %p126
      %p128 = scmp.ne.s32.totalorder %s117, %s118
      %p129 = scmp.eq.s32.totalorder %s20, 0
      %p130 = por %p128, %p129
      %p131 = scmp.ne.s32.totalorder %s117, %s118
      %p132 = scmp.eq.s32.totalorder %s21, 1
      %p133 = por %p131, %p132
      %p135 = scmp.ne.s32.totalorder %s118, %s134
      %p136 = scmp.eq.s32.totalorder %s21, 0
      %p137 = por %p135, %p136
      %p138 = scmp.le.s32.totalorder 1, %s15
      %p139 = scmp.lt.s32.totalorder %s15, 3
      %p140 = pnand %p138, %p139
      %p141 = pneg %p140
      // Predicated region
      $region9: #{tpu_custom_call.1} parent=5 // pred_check
        _
      $region10: #{tpu_custom_call.1} parent=5 // pred_check_branch
        %143 = sbr.rel (%p140) target = $region12
      $region11: #{tpu_custom_call.1} parent=5 // pred_region
        %s144 = ssub.s32 %s15, 1
        // Predicated region
        $region13: #{tpu_custom_call.1} parent=11 // pred_check
          %p145 = pneg %p36
        $region14: #{tpu_custom_call.1} parent=11 // pred_check_branch
          %147 = sbr.rel (%p145) target = $region16
        $region15: #{tpu_custom_call.1} parent=11 // pred_region
          %s149 = ssub.s32 6656, 6656
          %150 = vsyncadd [#allocation3], %s149
          %s151 = sshll.u32 [#allocation2], 4
          %s152 = int_to_ptr.vmem [resolvable:$true] %s151
          %157 = dma.hbm_to_vmem [thread:$0]  %s0, 6656, %s152, [#allocation3], 256, 256, 16
        $region16: #{tpu_custom_call.1} parent=11 // pred_fallthru
          _
        // Predicated region
        $region17: #{tpu_custom_call.1} parent=11 // pred_check
          %p158 = pneg %p57
        $region18: #{tpu_custom_call.1} parent=11 // pred_check_branch
          %160 = sbr.rel (%p158) target = $region20
        $region19: #{tpu_custom_call.1} parent=11 // pred_region
          _
        $region20: #{tpu_custom_call.1} parent=11 // pred_fallthru
          _
        // Predicated region
        $region21: #{tpu_custom_call.1} parent=11 // pred_check
          %p161 = pneg %p78
        $region22: #{tpu_custom_call.1} parent=11 // pred_check_branch
          %163 = sbr.rel (%p161) target = $region24
        $region23: #{tpu_custom_call.1} parent=11 // pred_region
          %s165 = ssub.s32 256, 256
          %166 = vsyncadd [#allocation6], %s165
          %s168 = sshll.u32 [#allocation5], 4
          %s169 = int_to_ptr.vmem [resolvable:$true] %s168
          %171 = dma.hbm_to_vmem [thread:$0]  %s2, 256, %s169, [#allocation6]
        $region24: #{tpu_custom_call.1} parent=11 // pred_fallthru
          _
      $region12: #{tpu_custom_call.1} parent=5 // pred_fallthru
        _
      %p172 = scmp.lt.s32.totalorder %s15, 2
      // Predicated region
      $region25: #{tpu_custom_call.1} parent=5 // pred_check
        %p173 = pneg %p172
      $region26: #{tpu_custom_call.1} parent=5 // pred_check_branch
        %175 = sbr.rel (%p173) target = $region28
      $region27: #{tpu_custom_call.1} parent=5 // pred_region
        // Predicated region
        $region29: #{tpu_custom_call.1} parent=27 // pred_check
          %p176 = pneg %p98
        $region30: #{tpu_custom_call.1} parent=27 // pred_check_branch
          %178 = sbr.rel (%p176) target = $region32
        $region31: #{tpu_custom_call.1} parent=27 // pred_region
          %s179 = sand.u32 %s15, 1
          %s180 = scalar_lea.sflag [#allocation3], %s179
          %s181 = sand.u32 %s88, 1
          %s182 = smul.addr %s181, 8
          %s183 = scalar_lea.vmem [#allocation7], %s182
          %s184 = smul.u32 2, %s15
          %s186 = ssub.s32 128, 128
          %187 = vsyncadd %s180, %s186
          %s188 = smul.addr %s184, 64
          %s189 = scalar_lea.hbm %s3, %s188
          %s191 = sshll.u32 %s183, 4
          %s192 = int_to_ptr.vmem [resolvable:$true] %s191
          %194 = dma.hbm_to_vmem [thread:$0]  %s189, 128, %s192, %s180
        $region32: #{tpu_custom_call.1} parent=27 // pred_fallthru
          _
      $region28: #{tpu_custom_call.1} parent=5 // pred_fallthru
        _
      %p195 = scmp.le.s32.totalorder 1, %s15
      %p196 = scmp.lt.s32.totalorder %s15, 3
      %p197 = pnand %p195, %p196
      %p198 = pneg %p197
      // Predicated region
      $region33: #{tpu_custom_call.1} parent=5 // pred_check
        _
      $region34: #{tpu_custom_call.1} parent=5 // pred_check_branch
        %200 = sbr.rel (%p197) target = $region36
      $region35: #{tpu_custom_call.1} parent=5 // pred_region
        %s201 = ssub.s32 %s15, 1
        // Predicated region
        $region37: #{tpu_custom_call.1} parent=35 // pred_check
          %p202 = pneg %p36
        $region38: #{tpu_custom_call.1} parent=35 // pred_check_branch
          %204 = sbr.rel (%p202) target = $region40
        $region39: #{tpu_custom_call.1} parent=35 // pred_region
          %205 = dma.done [#allocation3], 6656
        $region40: #{tpu_custom_call.1} parent=35 // pred_fallthru
          _
        // Predicated region
        $region41: #{tpu_custom_call.1} parent=35 // pred_check
          %p206 = pneg %p78
        $region42: #{tpu_custom_call.1} parent=35 // pred_check_branch
          %208 = sbr.rel (%p206) target = $region44
        $region43: #{tpu_custom_call.1} parent=35 // pred_region
          %209 = dma.done [#allocation6], 256
        $region44: #{tpu_custom_call.1} parent=35 // pred_fallthru
          _
        %s210 = sand.u32 %s20, 1
        %s211 = scalar_lea.sflag [#allocation3], %s210
        %s212 = sand.u32 %s91, 1
        %s213 = smul.addr %s212, 8
        %s214 = scalar_lea.vmem [#allocation7], %s213
        // Predicated region
        $region45: #{tpu_custom_call.1} parent=35 // pred_check
          %p215 = pneg %p104
        $region46: #{tpu_custom_call.1} parent=35 // pred_check_branch
          %217 = sbr.rel (%p215) target = $region48
        $region47: #{tpu_custom_call.1} parent=35 // pred_region
          %218 = dma.done %s211, 128
        $region48: #{tpu_custom_call.1} parent=35 // pred_fallthru
          _
        %p219 = pneg %p36
        %p220 = pneg %p33
        %p221 = pneg %p57
        %p222 = pneg %p54
        %p223 = pneg %p78
        %p224 = pneg %p75
        %s225 = sand.u32 %s20, 1
        %s226 = scalar_lea.sflag [#allocation3], %s225
        %s227 = sand.u32 %s91, 1
        %s228 = smul.addr %s227, 8
        %s229 = scalar_lea.vmem [#allocation7], %s228
        %p230 = pneg %p104
        %p231 = pneg %p101
        %p232 = pneg %p130
        %p233 = pneg %p127
        %s234 = sand.u32 %s117, 1
        %s235 = scalar_lea.sflag [#allocation4], %s234
        %s236 = sand.u32 %s117, 1
        %s237 = smul.addr %s236, 16
        %s238 = scalar_lea.vmem [#allocation8], %s237
        %s239 = smul.u32 2, %s20
        %s240 = smul.u32 2, %s20
        %v241 = vld [vmem:[%s214] sm:$0xff]
        %v242 = vld [vmem:[%s1] sm:$0xff]
        %244 = vset.pattern.permute.xlu0 0
        %245 = vperm.xlu0 %244, %v242
        %v246 = vpop.permute.xlu0 %245
        %v249 = vcombine.high %v241, %v241
        %251 = vrot.lane.b32.xlu0 %v241, 17
        %v252 = vpop.permute.xlu0 %251
        %253 = vrot.lane.b32.xlu0 %v249, 17
        %v254 = vpop.permute.xlu0 %253
        %v255 = vlaneseq
        %v256 = vand.u32 %v255, 127
        %vm257 = vcmp.lt.s32.totalorder %v256, 17
        %v258 = vsel %vm257, %v252, %v254
        %v259 = vsel %vm257, %v254, %v252
        %v260 = vld [vmem:[#allocation5] ss:$8 sm:$0x3]
        %v262 = vlaneseq
        %v263 = vshrl.u32 %v262, 7
        %v264 = vsub.s32 0, %v263
        %v265 = vrot.slane %v260, %v264
        %v266 = vlaneseq
        %v267 = vshrl.u32 %v266, 7
        %v268 = vsub.s32 1, %v267
        %v269 = vrot.slane %v260, %v268
        %v272 = vmul.f32 %v259, %v265
        %v273 = vmul.f32 %v258, %v269
        %v274 = vld [vmem:[#allocation2] sm:$0xff]
        %v275 = vld [vmem:[#allocation2 + $0x8] sm:$0xff]
        %v276 = vlaneseq
        %v277 = vshrl.u32 %v276, 7
        %v278 = vsub.s32 0, %v277
        %v279 = vrot.slane %v272, %v278
        %v280 = vlaneseq
        %v281 = vshrl.u32 %v280, 7
        %v282 = vsub.s32 0, %v281
        %v283 = vrot.slane %v273, %v282
        %v284 = vmul.f32 %v274, %v279
        %v285 = vmul.f32 %v275, %v283
        %v286 = vadd.f32 %v246, %v284
        %v287 = vadd.f32 %v246, %v285
        %s288 = scalar_lea.vmem [#allocation2], 16
        %v289 = vld [vmem:[%s288] sm:$0xff]
        %v290 = vld [vmem:[%s288 + $0x8] sm:$0xff]
        %v291 = vlaneseq
        %v292 = vshrl.u32 %v291, 7
        %v293 = vsub.s32 1, %v292
        %v294 = vrot.slane %v272, %v293
        %v295 = vlaneseq
        %v296 = vshrl.u32 %v295, 7
        %v297 = vsub.s32 1, %v296
        %v298 = vrot.slane %v273, %v297
        %v299 = vmul.f32 %v289, %v294
        %v300 = vmul.f32 %v290, %v298
        %v301 = vadd.f32 %v299, 0.0
        %v302 = vadd.f32 %v300, 0.0
        %s303 = scalar_lea.vmem [#allocation2], 32
        %v304 = vld [vmem:[%s303] sm:$0xff]
        %v305 = vld [vmem:[%s303 + $0x8] sm:$0xff]
        %v306 = vlaneseq
        %v307 = vshrl.u32 %v306, 7
        %v308 = vsub.s32 2, %v307
        %v309 = vrot.slane %v272, %v308
        %v310 = vlaneseq
        %v311 = vshrl.u32 %v310, 7
        %v312 = vsub.s32 2, %v311
        %v313 = vrot.slane %v273, %v312
        %v314 = vmul.f32 %v304, %v309
        %v315 = vmul.f32 %v305, %v313
        %v316 = vadd.f32 %v314, 0.0
        %v317 = vadd.f32 %v315, 0.0
        %s318 = scalar_lea.vmem [#allocation2], 48
        %v319 = vld [vmem:[%s318] sm:$0xff]
        %v320 = vld [vmem:[%s318 + $0x8] sm:$0xff]
        %v321 = vlaneseq
        %v322 = vshrl.u32 %v321, 7
        %v323 = vsub.s32 3, %v322
        %v324 = vrot.slane %v272, %v323
        %v325 = vlaneseq
        %v326 = vshrl.u32 %v325, 7
        %v327 = vsub.s32 3, %v326
        %v328 = vrot.slane %v273, %v327
        %v329 = vmul.f32 %v319, %v324
        %v330 = vmul.f32 %v320, %v328
        %v331 = vadd.f32 %v329, 0.0
        %v332 = vadd.f32 %v330, 0.0
        %333 = vrot.lane.b32.xlu0 %v241, 16
        %v334 = vpop.permute.xlu0 %333
        %335 = vrot.lane.b32.xlu0 %v249, 16
        %v336 = vpop.permute.xlu0 %335
        %vm337 = vcmp.lt.s32.totalorder %v256, 16
        %v338 = vsel %vm337, %v334, %v336
        %v339 = vsel %vm337, %v336, %v334
        %s340 = scalar_lea.vmem [#allocation5], 1
        %v341 = vld [vmem:[%s340] ss:$8 sm:$0x3]
        %v343 = vlaneseq
        %v344 = vshrl.u32 %v343, 7
        %v345 = vsub.s32 0, %v344
        %v346 = vrot.slane %v341, %v345
        %v347 = vlaneseq
        %v348 = vshrl.u32 %v347, 7
        %v349 = vsub.s32 1, %v348
        %v350 = vrot.slane %v341, %v349
        %v353 = vmul.f32 %v339, %v346
        %v354 = vmul.f32 %v338, %v350
        %s355 = scalar_lea.vmem [#allocation2], 64
        %v356 = vld [vmem:[%s355] sm:$0xff]
        %v357 = vld [vmem:[%s355 + $0x8] sm:$0xff]
        %v358 = vlaneseq
        %v359 = vshrl.u32 %v358, 7
        %v360 = vsub.s32 0, %v359
        %v361 = vrot.slane %v353, %v360
        %v362 = vlaneseq
        %v363 = vshrl.u32 %v362, 7
        %v364 = vsub.s32 0, %v363
        %v365 = vrot.slane %v354, %v364
        %v366 = vmul.f32 %v356, %v361
        %v367 = vmul.f32 %v357, %v365
        %v368 = vadd.f32 %v286, %v366
        %v369 = vadd.f32 %v287, %v367
        %s370 = scalar_lea.vmem [#allocation2], 80
        %v371 = vld [vmem:[%s370] sm:$0xff]
        %v372 = vld [vmem:[%s370 + $0x8] sm:$0xff]
        %v373 = vlaneseq
        %v374 = vshrl.u32 %v373, 7
        %v375 = vsub.s32 1, %v374
        %v376 = vrot.slane %v353, %v375
        %v377 = vlaneseq
        %v378 = vshrl.u32 %v377, 7
        %v379 = vsub.s32 1, %v378
        %v380 = vrot.slane %v354, %v379
        %v381 = vmul.f32 %v371, %v376
        %v382 = vmul.f32 %v372, %v380
        %v383 = vadd.f32 %v301, %v381
        %v384 = vadd.f32 %v302, %v382
        %s385 = scalar_lea.vmem [#allocation2], 96
        %v386 = vld [vmem:[%s385] sm:$0xff]
        %v387 = vld [vmem:[%s385 + $0x8] sm:$0xff]
        %v388 = vlaneseq
        %v389 = vshrl.u32 %v388, 7
        %v390 = vsub.s32 2, %v389
        %v391 = vrot.slane %v353, %v390
        %v392 = vlaneseq
        %v393 = vshrl.u32 %v392, 7
        %v394 = vsub.s32 2, %v393
        %v395 = vrot.slane %v354, %v394
        %v396 = vmul.f32 %v386, %v391
        %v397 = vmul.f32 %v387, %v395
        %v398 = vadd.f32 %v316, %v396
        %v399 = vadd.f32 %v317, %v397
        %s400 = scalar_lea.vmem [#allocation2], 112
        %v401 = vld [vmem:[%s400] sm:$0xff]
        %v402 = vld [vmem:[%s400 + $0x8] sm:$0xff]
        %v403 = vlaneseq
        %v404 = vshrl.u32 %v403, 7
        %v405 = vsub.s32 3, %v404
        %v406 = vrot.slane %v353, %v405
        %v407 = vlaneseq
        %v408 = vshrl.u32 %v407, 7
        %v409 = vsub.s32 3, %v408
        %v410 = vrot.slane %v354, %v409
        %v411 = vmul.f32 %v401, %v406
        %v412 = vmul.f32 %v402, %v410
        %v413 = vadd.f32 %v331, %v411
        %v414 = vadd.f32 %v332, %v412
        %415 = vrot.lane.b32.xlu0 %v241, 15
        %v416 = vpop.permute.xlu0 %415
        %417 = vrot.lane.b32.xlu0 %v249, 15
        %v418 = vpop.permute.xlu0 %417
        %vm419 = vcmp.lt.s32.totalorder %v256, 15
        %v420 = vsel %vm419, %v416, %v418
        %v421 = vsel %vm419, %v418, %v416
        %s422 = scalar_lea.vmem [#allocation5], 2
        %v423 = vld [vmem:[%s422] ss:$8 sm:$0x3]
        %v425 = vlaneseq
        %v426 = vshrl.u32 %v425, 7
        %v427 = vsub.s32 0, %v426
        %v428 = vrot.slane %v423, %v427
        %v429 = vlaneseq
        %v430 = vshrl.u32 %v429, 7
        %v431 = vsub.s32 1, %v430
        %v432 = vrot.slane %v423, %v431
        %v435 = vmul.f32 %v421, %v428
        %v436 = vmul.f32 %v420, %v432
        %s437 = scalar_lea.vmem [#allocation2], 128
        %v438 = vld [vmem:[%s437] sm:$0xff]
        %v439 = vld [vmem:[%s437 + $0x8] sm:$0xff]
        %v440 = vlaneseq
        %v441 = vshrl.u32 %v440, 7
        %v442 = vsub.s32 0, %v441
        %v443 = vrot.slane %v435, %v442
        %v444 = vlaneseq
        %v445 = vshrl.u32 %v444, 7
        %v446 = vsub.s32 0, %v445
        %v447 = vrot.slane %v436, %v446
        %v448 = vmul.f32 %v438, %v443
        %v449 = vmul.f32 %v439, %v447
        %v450 = vadd.f32 %v368, %v448
        %v451 = vadd.f32 %v369, %v449
        %s452 = scalar_lea.vmem [#allocation2], 144
        %v453 = vld [vmem:[%s452] sm:$0xff]
        %v454 = vld [vmem:[%s452 + $0x8] sm:$0xff]
        %v455 = vlaneseq
        %v456 = vshrl.u32 %v455, 7
        %v457 = vsub.s32 1, %v456
        %v458 = vrot.slane %v435, %v457
        %v459 = vlaneseq
        %v460 = vshrl.u32 %v459, 7
        %v461 = vsub.s32 1, %v460
        %v462 = vrot.slane %v436, %v461
        %v463 = vmul.f32 %v453, %v458
        %v464 = vmul.f32 %v454, %v462
        %v465 = vadd.f32 %v383, %v463
        %v466 = vadd.f32 %v384, %v464
        %s467 = scalar_lea.vmem [#allocation2], 160
        %v468 = vld [vmem:[%s467] sm:$0xff]
        %v469 = vld [vmem:[%s467 + $0x8] sm:$0xff]
        %v470 = vlaneseq
        %v471 = vshrl.u32 %v470, 7
        %v472 = vsub.s32 2, %v471
        %v473 = vrot.slane %v435, %v472
        %v474 = vlaneseq
        %v475 = vshrl.u32 %v474, 7
        %v476 = vsub.s32 2, %v475
        %v477 = vrot.slane %v436, %v476
        %v478 = vmul.f32 %v468, %v473
        %v479 = vmul.f32 %v469, %v477
        %v480 = vadd.f32 %v398, %v478
        %v481 = vadd.f32 %v399, %v479
        %s482 = scalar_lea.vmem [#allocation2], 176
        %v483 = vld [vmem:[%s482] sm:$0xff]
        %v484 = vld [vmem:[%s482 + $0x8] sm:$0xff]
        %v485 = vlaneseq
        %v486 = vshrl.u32 %v485, 7
        %v487 = vsub.s32 3, %v486
        %v488 = vrot.slane %v435, %v487
        %v489 = vlaneseq
        %v490 = vshrl.u32 %v489, 7
        %v491 = vsub.s32 3, %v490
        %v492 = vrot.slane %v436, %v491
        %v493 = vmul.f32 %v483, %v488
        %v494 = vmul.f32 %v484, %v492
        %v495 = vadd.f32 %v413, %v493
        %v496 = vadd.f32 %v414, %v494
        %497 = vrot.lane.b32.xlu0 %v241, 1
        %v498 = vpop.permute.xlu0 %497
        %499 = vrot.lane.b32.xlu0 %v249, 1
        %v500 = vpop.permute.xlu0 %499
        %vm501 = vcmp.lt.s32.totalorder %v256, 1
        %v502 = vsel %vm501, %v498, %v500
        %v503 = vsel %vm501, %v500, %v498
        %s504 = scalar_lea.vmem [#allocation5], 3
        %v505 = vld [vmem:[%s504] ss:$8 sm:$0x3]
        %v507 = vlaneseq
        %v508 = vshrl.u32 %v507, 7
        %v509 = vsub.s32 0, %v508
        %v510 = vrot.slane %v505, %v509
        %v511 = vlaneseq
        %v512 = vshrl.u32 %v511, 7
        %v513 = vsub.s32 1, %v512
        %v514 = vrot.slane %v505, %v513
        %v517 = vmul.f32 %v503, %v510
        %v518 = vmul.f32 %v502, %v514
        %s519 = scalar_lea.vmem [#allocation2], 192
        %v520 = vld [vmem:[%s519] sm:$0xff]
        %v521 = vld [vmem:[%s519 + $0x8] sm:$0xff]
        %v522 = vlaneseq
        %v523 = vshrl.u32 %v522, 7
        %v524 = vsub.s32 0, %v523
        %v525 = vrot.slane %v517, %v524
        %v526 = vlaneseq
        %v527 = vshrl.u32 %v526, 7
        %v528 = vsub.s32 0, %v527
        %v529 = vrot.slane %v518, %v528
        %v530 = vmul.f32 %v520, %v525
        %v531 = vmul.f32 %v521, %v529
        %v532 = vadd.f32 %v450, %v530
        %v533 = vadd.f32 %v451, %v531
        %s534 = scalar_lea.vmem [#allocation2], 208
        %v535 = vld [vmem:[%s534] sm:$0xff]
        %v536 = vld [vmem:[%s534 + $0x8] sm:$0xff]
        %v537 = vlaneseq
        %v538 = vshrl.u32 %v537, 7
        %v539 = vsub.s32 1, %v538
        %v540 = vrot.slane %v517, %v539
        %v541 = vlaneseq
        %v542 = vshrl.u32 %v541, 7
        %v543 = vsub.s32 1, %v542
        %v544 = vrot.slane %v518, %v543
        %v545 = vmul.f32 %v535, %v540
        %v546 = vmul.f32 %v536, %v544
        %v547 = vadd.f32 %v465, %v545
        %v548 = vadd.f32 %v466, %v546
        %s549 = scalar_lea.vmem [#allocation2], 224
        %v550 = vld [vmem:[%s549] sm:$0xff]
        %v551 = vld [vmem:[%s549 + $0x8] sm:$0xff]
        %v552 = vlaneseq
        %v553 = vshrl.u32 %v552, 7
        %v554 = vsub.s32 2, %v553
        %v555 = vrot.slane %v517, %v554
        %v556 = vlaneseq
        %v557 = vshrl.u32 %v556, 7
        %v558 = vsub.s32 2, %v557
        %v559 = vrot.slane %v518, %v558
        %v560 = vmul.f32 %v550, %v555
        %v561 = vmul.f32 %v551, %v559
        %v562 = vadd.f32 %v480, %v560
        %v563 = vadd.f32 %v481, %v561
        %s564 = scalar_lea.vmem [#allocation2], 240
        %v565 = vld [vmem:[%s564] sm:$0xff]
        %v566 = vld [vmem:[%s564 + $0x8] sm:$0xff]
        %v567 = vlaneseq
        %v568 = vshrl.u32 %v567, 7
        %v569 = vsub.s32 3, %v568
        %v570 = vrot.slane %v517, %v569
        %v571 = vlaneseq
        %v572 = vshrl.u32 %v571, 7
        %v573 = vsub.s32 3, %v572
        %v574 = vrot.slane %v518, %v573
        %v575 = vmul.f32 %v565, %v570
        %v576 = vmul.f32 %v566, %v574
        %v577 = vadd.f32 %v495, %v575
        %v578 = vadd.f32 %v496, %v576
        %s579 = scalar_lea.vmem [#allocation2], 256
        %v580 = vld [vmem:[%s579] sm:$0xff]
        %v581 = vld [vmem:[%s579 + $0x8] sm:$0xff]
        %v582 = vlaneseq
        %v583 = vshrl.u32 %v582, 7
        %v584 = vsub.s32 2, %v583
        %v585 = vrot.slane %v241, %v584
        %v586 = vlaneseq
        %v587 = vshrl.u32 %v586, 7
        %v588 = vsub.s32 6, %v587
        %v589 = vrot.slane %v241, %v588
        %v592 = vlaneseq
        %v593 = vshrl.u32 %v592, 7
        %v594 = vsub.s32 2, %v593
        %v595 = vrot.slane %v585, %v594
        %v596 = vlaneseq
        %v597 = vshrl.u32 %v596, 7
        %v598 = vsub.s32 2, %v597
        %v599 = vrot.slane %v589, %v598
        %v600 = vmul.f32 %v580, %v595
        %v601 = vmul.f32 %v581, %v599
        %v602 = vadd.f32 %v532, %v600
        %v603 = vadd.f32 %v533, %v601
        %s604 = scalar_lea.vmem [#allocation2], 272
        %v605 = vld [vmem:[%s604] sm:$0xff]
        %v606 = vld [vmem:[%s604 + $0x8] sm:$0xff]
        %v607 = vlaneseq
        %v608 = vshrl.u32 %v607, 7
        %v609 = vsub.s32 3, %v608
        %v610 = vrot.slane %v241, %v609
        %v611 = vlaneseq
        %v612 = vshrl.u32 %v611, 7
        %v613 = vsub.s32 7, %v612
        %v614 = vrot.slane %v241, %v613
        %v617 = vlaneseq
        %v618 = vshrl.u32 %v617, 7
        %v619 = vsub.s32 3, %v618
        %v620 = vrot.slane %v610, %v619
        %v621 = vlaneseq
        %v622 = vshrl.u32 %v621, 7
        %v623 = vsub.s32 3, %v622
        %v624 = vrot.slane %v614, %v623
        %v625 = vmul.f32 %v605, %v620
        %v626 = vmul.f32 %v606, %v624
        %v627 = vadd.f32 %v547, %v625
        %v628 = vadd.f32 %v548, %v626
        %629 = vrot.lane.b32.xlu0 %v241, 127
        %v630 = vpop.permute.xlu0 %629
        %631 = vrot.lane.b32.xlu0 %v249, 127
        %v632 = vpop.permute.xlu0 %631
        %vm633 = vcmp.lt.s32.totalorder %v256, 127
        %v634 = vsel %vm633, %v630, %v632
        %v635 = vsel %vm633, %v632, %v630
        %s636 = scalar_lea.vmem [#allocation5], 4
        %v637 = vld [vmem:[%s636] ss:$8 sm:$0x3]
        %v639 = vlaneseq
        %v640 = vshrl.u32 %v639, 7
        %v641 = vsub.s32 0, %v640
        %v642 = vrot.slane %v637, %v641
        %v643 = vlaneseq
        %v644 = vshrl.u32 %v643, 7
        %v645 = vsub.s32 1, %v644
        %v646 = vrot.slane %v637, %v645
        %v649 = vmul.f32 %v634, %v642
        %v650 = vmul.f32 %v635, %v646
        %s651 = scalar_lea.vmem [#allocation2], 288
        %v652 = vld [vmem:[%s651] sm:$0xff]
        %v653 = vld [vmem:[%s651 + $0x8] sm:$0xff]
        %v654 = vlaneseq
        %v655 = vshrl.u32 %v654, 7
        %v656 = vsub.s32 2, %v655
        %v657 = vrot.slane %v649, %v656
        %v658 = vlaneseq
        %v659 = vshrl.u32 %v658, 7
        %v660 = vsub.s32 2, %v659
        %v661 = vrot.slane %v650, %v660
        %v662 = vmul.f32 %v652, %v657
        %v663 = vmul.f32 %v653, %v661
        %v664 = vadd.f32 %v562, %v662
        %v665 = vadd.f32 %v563, %v663
        %s666 = scalar_lea.vmem [#allocation2], 304
        %v667 = vld [vmem:[%s666] sm:$0xff]
        %v668 = vld [vmem:[%s666 + $0x8] sm:$0xff]
        %v669 = vlaneseq
        %v670 = vshrl.u32 %v669, 7
        %v671 = vsub.s32 3, %v670
        %v672 = vrot.slane %v649, %v671
        %v673 = vlaneseq
        %v674 = vshrl.u32 %v673, 7
        %v675 = vsub.s32 3, %v674
        %v676 = vrot.slane %v650, %v675
        %v677 = vmul.f32 %v667, %v672
        %v678 = vmul.f32 %v668, %v676
        %v679 = vadd.f32 %v577, %v677
        %v680 = vadd.f32 %v578, %v678
        %681 = vrot.lane.b32.xlu0 %v241, 113
        %v682 = vpop.permute.xlu0 %681
        %683 = vrot.lane.b32.xlu0 %v249, 113
        %v684 = vpop.permute.xlu0 %683
        %vm685 = vcmp.lt.s32.totalorder %v256, 113
        %v686 = vsel %vm685, %v682, %v684
        %v687 = vsel %vm685, %v684, %v682
        %s688 = scalar_lea.vmem [#allocation5], 5
        %v689 = vld [vmem:[%s688] ss:$8 sm:$0x3]
        %v691 = vlaneseq
        %v692 = vshrl.u32 %v691, 7
        %v693 = vsub.s32 0, %v692
        %v694 = vrot.slane %v689, %v693
        %v695 = vlaneseq
        %v696 = vshrl.u32 %v695, 7
        %v697 = vsub.s32 1, %v696
        %v698 = vrot.slane %v689, %v697
        %v701 = vmul.f32 %v686, %v694
        %v702 = vmul.f32 %v687, %v698
        %s703 = scalar_lea.vmem [#allocation2], 320
        %v704 = vld [vmem:[%s703] sm:$0xff]
        %v705 = vld [vmem:[%s703 + $0x8] sm:$0xff]
        %v706 = vlaneseq
        %v707 = vshrl.u32 %v706, 7
        %v708 = vsub.s32 2, %v707
        %v709 = vrot.slane %v701, %v708
        %v710 = vlaneseq
        %v711 = vshrl.u32 %v710, 7
        %v712 = vsub.s32 2, %v711
        %v713 = vrot.slane %v702, %v712
        %v714 = vmul.f32 %v704, %v709
        %v715 = vmul.f32 %v705, %v713
        %v716 = vadd.f32 %v602, %v714
        %v717 = vadd.f32 %v603, %v715
        %s718 = scalar_lea.vmem [#allocation2], 336
        %v719 = vld [vmem:[%s718] sm:$0xff]
        %v720 = vld [vmem:[%s718 + $0x8] sm:$0xff]
        %v721 = vlaneseq
        %v722 = vshrl.u32 %v721, 7
        %v723 = vsub.s32 3, %v722
        %v724 = vrot.slane %v701, %v723
        %v725 = vlaneseq
        %v726 = vshrl.u32 %v725, 7
        %v727 = vsub.s32 3, %v726
        %v728 = vrot.slane %v702, %v727
        %v729 = vmul.f32 %v719, %v724
        %v730 = vmul.f32 %v720, %v728
        %v731 = vadd.f32 %v627, %v729
        %v732 = vadd.f32 %v628, %v730
        %733 = vrot.lane.b32.xlu0 %v241, 112
        %v734 = vpop.permute.xlu0 %733
        %735 = vrot.lane.b32.xlu0 %v249, 112
        %v736 = vpop.permute.xlu0 %735
        %vm737 = vcmp.lt.s32.totalorder %v256, 112
        %v738 = vsel %vm737, %v734, %v736
        %v739 = vsel %vm737, %v736, %v734
        %s740 = scalar_lea.vmem [#allocation5], 6
        %v741 = vld [vmem:[%s740] ss:$8 sm:$0x3]
        %v743 = vlaneseq
        %v744 = vshrl.u32 %v743, 7
        %v745 = vsub.s32 0, %v744
        %v746 = vrot.slane %v741, %v745
        %v747 = vlaneseq
        %v748 = vshrl.u32 %v747, 7
        %v749 = vsub.s32 1, %v748
        %v750 = vrot.slane %v741, %v749
        %v753 = vmul.f32 %v738, %v746
        %v754 = vmul.f32 %v739, %v750
        %s755 = scalar_lea.vmem [#allocation2], 352
        %v756 = vld [vmem:[%s755] sm:$0xff]
        %v757 = vld [vmem:[%s755 + $0x8] sm:$0xff]
        %v758 = vlaneseq
        %v759 = vshrl.u32 %v758, 7
        %v760 = vsub.s32 2, %v759
        %v761 = vrot.slane %v753, %v760
        %v762 = vlaneseq
        %v763 = vshrl.u32 %v762, 7
        %v764 = vsub.s32 2, %v763
        %v765 = vrot.slane %v754, %v764
        %v766 = vmul.f32 %v756, %v761
        %v767 = vmul.f32 %v757, %v765
        %v768 = vadd.f32 %v664, %v766
        %v769 = vadd.f32 %v665, %v767
        %s770 = scalar_lea.vmem [#allocation2], 368
        %v771 = vld [vmem:[%s770] sm:$0xff]
        %v772 = vld [vmem:[%s770 + $0x8] sm:$0xff]
        %v773 = vlaneseq
        %v774 = vshrl.u32 %v773, 7
        %v775 = vsub.s32 3, %v774
        %v776 = vrot.slane %v753, %v775
        %v777 = vlaneseq
        %v778 = vshrl.u32 %v777, 7
        %v779 = vsub.s32 3, %v778
        %v780 = vrot.slane %v754, %v779
        %v781 = vmul.f32 %v771, %v776
        %v782 = vmul.f32 %v772, %v780
        %v783 = vadd.f32 %v679, %v781
        %v784 = vadd.f32 %v680, %v782
        %785 = vrot.lane.b32.xlu0 %v241, 111
        %v786 = vpop.permute.xlu0 %785
        %787 = vrot.lane.b32.xlu0 %v249, 111
        %v788 = vpop.permute.xlu0 %787
        %vm789 = vcmp.lt.s32.totalorder %v256, 111
        %v790 = vsel %vm789, %v786, %v788
        %v791 = vsel %vm789, %v788, %v786
        %s792 = scalar_lea.vmem [#allocation5], 7
        %v793 = vld [vmem:[%s792] ss:$8 sm:$0x3]
        %v795 = vlaneseq
        %v796 = vshrl.u32 %v795, 7
        %v797 = vsub.s32 0, %v796
        %v798 = vrot.slane %v793, %v797
        %v799 = vlaneseq
        %v800 = vshrl.u32 %v799, 7
        %v801 = vsub.s32 1, %v800
        %v802 = vrot.slane %v793, %v801
        %v805 = vmul.f32 %v790, %v798
        %v806 = vmul.f32 %v791, %v802
        %s807 = scalar_lea.vmem [#allocation2], 384
        %v808 = vld [vmem:[%s807] sm:$0xff]
        %v809 = vld [vmem:[%s807 + $0x8] sm:$0xff]
        %v810 = vlaneseq
        %v811 = vshrl.u32 %v810, 7
        %v812 = vsub.s32 2, %v811
        %v813 = vrot.slane %v805, %v812
        %v814 = vlaneseq
        %v815 = vshrl.u32 %v814, 7
        %v816 = vsub.s32 2, %v815
        %v817 = vrot.slane %v806, %v816
        %v818 = vmul.f32 %v808, %v813
        %v819 = vmul.f32 %v809, %v817
        %v820 = vadd.f32 %v716, %v818
        %v821 = vadd.f32 %v717, %v819
        %s822 = scalar_lea.vmem [#allocation2], 400
        %v823 = vld [vmem:[%s822] sm:$0xff]
        %v824 = vld [vmem:[%s822 + $0x8] sm:$0xff]
        %v825 = vlaneseq
        %v826 = vshrl.u32 %v825, 7
        %v827 = vsub.s32 3, %v826
        %v828 = vrot.slane %v805, %v827
        %v829 = vlaneseq
        %v830 = vshrl.u32 %v829, 7
        %v831 = vsub.s32 3, %v830
        %v832 = vrot.slane %v806, %v831
        %v833 = vmul.f32 %v823, %v828
        %v834 = vmul.f32 %v824, %v832
        %v835 = vadd.f32 %v731, %v833
        %v836 = vadd.f32 %v732, %v834
        %v837 = vadd.f32 %v820, %v835
        %v838 = vadd.f32 %v821, %v836
        %v839 = vadd.f32 %v837, %v768
        %v840 = vadd.f32 %v838, %v769
        %v841 = vadd.f32 %v839, %v783
        %v842 = vadd.f32 %v840, %v784
        %vm843 = vcmp.gt.f32.partialorder %v841, 0.0
        %vm844 = vcmp.gt.f32.partialorder %v842, 0.0
        %v845 = vmul.f32 %v841, 1.442695
        %v846 = vpow.pop %v845
        %v847 = vmul.f32 %v842, 1.442695
        %v848 = vpow.pop %v847
        %v849 = vsub.f32 %v846, 1.0
        %v850 = vsub.f32 %v848, 1.0
        %v851 = vsel %vm843, %v841, %v849
        %v852 = vsel %vm844, %v842, %v850
        %853 = vst [vmem:[%s238] sm:$0xff] %v851
        %854 = vst [vmem:[%s238 + $0x8] sm:$0xff] %v852
        %s855 = sand.u32 %s117, 1
        %s856 = scalar_lea.sflag [#allocation4], %s855
        %s857 = sand.u32 %s117, 1
        %s858 = smul.addr %s857, 16
        %s859 = scalar_lea.vmem [#allocation8], %s858
        // Predicated region
        $region49: #{tpu_custom_call.1} parent=35 // pred_check
          %p860 = pneg %p127
        $region50: #{tpu_custom_call.1} parent=35 // pred_check_branch
          %862 = sbr.rel (%p860) target = $region52
        $region51: #{tpu_custom_call.1} parent=35 // pred_region
          %s863 = smul.u32 2, %s20
          %s865 = ssub.s32 256, 256
          %866 = vsyncadd %s856, %s865
          %s867 = smul.addr %s863, 128
          %s868 = scalar_lea.hbm %s4, %s867
          %s870 = sshll.u32 %s859, 4
          %s871 = int_to_ptr.vmem [resolvable:$true] %s870
          %873 = dma.vmem_to_hbm [thread:$0]  %s871, 256, %s868, %s856
        $region52: #{tpu_custom_call.1} parent=35 // pred_fallthru
          _
      $region36: #{tpu_custom_call.1} parent=5 // pred_fallthru
        _
      %p874 = scmp.le.s32.totalorder 2, %s15
      // Predicated region
      $region53: #{tpu_custom_call.1} parent=5 // pred_check
        %p875 = pneg %p874
      $region54: #{tpu_custom_call.1} parent=5 // pred_check_branch
        %877 = sbr.rel (%p875) target = $region56
      $region55: #{tpu_custom_call.1} parent=5 // pred_region
        %s878 = ssub.s32 %s15, 2
        // Predicated region
        $region57: #{tpu_custom_call.1} parent=55 // pred_check
          %p879 = pneg %p133
        $region58: #{tpu_custom_call.1} parent=55 // pred_check_branch
          %881 = sbr.rel (%p879) target = $region60
        $region59: #{tpu_custom_call.1} parent=55 // pred_region
          %s882 = sand.u32 %s118, 1
          %s883 = scalar_lea.sflag [#allocation4], %s882
          %s884 = sand.u32 %s118, 1
          %s885 = smul.addr %s884, 16
          %s886 = scalar_lea.vmem [#allocation8], %s885
          %887 = dma.done %s883, 256
        $region60: #{tpu_custom_call.1} parent=55 // pred_fallthru
          _
      $region56: #{tpu_custom_call.1} parent=5 // pred_fallthru
        _
    $region6: #{tpu_custom_call.1} parent=1 // loop_footer
      %s19 = sadd.s32 1, %s15
    $region7: #{tpu_custom_call.1} parent=1 // loop_footer_branch
      %14 = sbr.rel target = $region3
    $region8: #{tpu_custom_call.1} parent=1 // loop_exit
      _
    %888 = vsyncpa [#allocation3], 1
    %s889 = scalar_lea.sflag [#allocation3], 1
    %890 = vsyncpa %s889, 1
    %891 = vsyncpa [#allocation6], 1
    %892 = vsyncpa [#allocation4], 1
    %s893 = scalar_lea.sflag [#allocation4], 1
    %894 = vsyncpa %s893, 1

</llo_original>
